<compile_context>
chip_gen: v7x
topology: tpu7x:2x2x1
jax: 0.10.0
libtpu: 0.0.40
codegen_flags: <defaults>
</compile_context>

<pallas_src>
import functools

import jax
import jax.numpy as jnp
from jax.experimental import pallas as pl
from jax.experimental.pallas import tpu as pltpu

INPUT_DIM = 3 + 3      # 6
HIDDEN_SIZE = 8
NUM_LAYERS = 2
OUTPUT_DIM = 4

# Packed-parameter layout: one (8, 32) f32 array.
_W0_OFF = 0                               # cols [0, 6)   : w0 (8, 6)
_W1_OFF = _W0_OFF + INPUT_DIM             # cols [6, 14)  : w1 (8, 8)
_W2_OFF = _W1_OFF + HIDDEN_SIZE           # cols [14, 22) : w2 (4, 8)
_B0_OFF = _W2_OFF + HIDDEN_SIZE           # col 22        : b0 (8, 1)
_B1_OFF = _B0_OFF + 1                     # col 23        : b1 (8, 1)
_B2_OFF = _B1_OFF + 1                     # col 24        : b2 (4, 1)
_PACK_ROWS = HIDDEN_SIZE                  # 8
_PACK_COLS = 32


def pack_params(params):
    """Pack the six parameter arrays into a single (8, 32) f32 array."""
    p = jnp.zeros((_PACK_ROWS, _PACK_COLS), jnp.float32)
    p = p.at[:HIDDEN_SIZE, _W0_OFF:_W0_OFF + INPUT_DIM].set(params["w0"])
    p = p.at[:HIDDEN_SIZE, _W1_OFF:_W1_OFF + HIDDEN_SIZE].set(params["w1"])
    p = p.at[:OUTPUT_DIM, _W2_OFF:_W2_OFF + HIDDEN_SIZE].set(params["w2"])
    p = p.at[:HIDDEN_SIZE, _B0_OFF:_B0_OFF + 1].set(params["b0"])
    p = p.at[:HIDDEN_SIZE, _B1_OFF:_B1_OFF + 1].set(params["b1"])
    p = p.at[:OUTPUT_DIM, _B2_OFF:_B2_OFF + 1].set(params["b2"])
    return p


def _dense_vpu(x, w, b, *, relu):
    """y = W @ x + b as unrolled VPU broadcast-MACs (no MXU / XLU matmul).

    x: (k_in, tn) f32 value, w: (out, k_in), b: (out, 1) -> (out, tn) f32.
    """
    out_dim, k_in = w.shape
    tn = x.shape[1]
    acc = jnp.broadcast_to(b, (out_dim, tn)).astype(jnp.float32)
    for k in range(k_in):                       # k_in in {6, 8}: fully unrolled
        # Hoisted lane-broadcast of the weight column (loop-invariant w.r.t.
        # the lane dimension, so the compiler materializes it once per k).
        wk = jnp.broadcast_to(w[:, k:k + 1], (out_dim, tn))
        xk = jnp.broadcast_to(x[k:k + 1, :], (out_dim, tn))
        acc = acc + wk * xk
    if relu:
        acc = jnp.maximum(acc, 0.0)
    return acc


def nerf_kernel(x_ref, p_ref, o_ref):
    x = x_ref[...].astype(jnp.float32)                        # (6, tn)
    p = p_ref[...]                                            # (8, 32) packed
    w0 = p[:HIDDEN_SIZE, _W0_OFF:_W0_OFF + INPUT_DIM]
    w1 = p[:HIDDEN_SIZE, _W1_OFF:_W1_OFF + HIDDEN_SIZE]
    w2 = p[:OUTPUT_DIM, _W2_OFF:_W2_OFF + HIDDEN_SIZE]
    b0 = p[:HIDDEN_SIZE, _B0_OFF:_B0_OFF + 1]
    b1 = p[:HIDDEN_SIZE, _B1_OFF:_B1_OFF + 1]
    b2 = p[:OUTPUT_DIM, _B2_OFF:_B2_OFF + 1]

    h = _dense_vpu(x, w0, b0, relu=True)                      # (8, tn)
    h = _dense_vpu(h, w1, b1, relu=True)                      # (8, tn)
    y = _dense_vpu(h, w2, b2, relu=False)                     # (4, tn)
    o_ref[...] = y.astype(o_ref.dtype)


def nerf_forward_feature_major(xt, packed_params, *, tn=32768):
    """Fast path: xt is [6, N] feature-major -> returns [4, N] (no transposes)."""
    D, N = xt.shape
    assert D == INPUT_DIM

    # Lane tile: multiple of 128, but never wider than the (padded) batch.
    tn = max(128, min(tn, pl.cdiv(N, 128) * 128))
    n_pad = pl.cdiv(N, tn) * tn
    if n_pad != N:
        xt = jnp.pad(xt, ((0, 0), (0, n_pad - N)))

    out_t = pl.pallas_call(
        nerf_kernel,
        out_shape=jax.ShapeDtypeStruct((OUTPUT_DIM, n_pad), xt.dtype),
        grid_spec=pltpu.PrefetchScalarGridSpec(
            num_scalar_prefetch=0,
            grid=(n_pad // tn,),
            in_specs=[
                pl.BlockSpec((INPUT_DIM, tn), lambda i: (0, i)),       # x tile
                pl.BlockSpec((_PACK_ROWS, _PACK_COLS), lambda i: (0, 0)),
            ],
            out_specs=pl.BlockSpec((OUTPUT_DIM, tn), lambda i: (0, i)),
        ),
        compiler_params=pltpu.CompilerParams(
            dimension_semantics=("parallel",)),
    )(xt, packed_params)

    return out_t[:, :N]                                        # (4, N)


@functools.partial(jax.jit, static_argnames=("tn",))
def nerf_forward(x, params, *, tn=32768):
    """nn.Module-compatible API: x [N, 6] float32 -> [N, 4].

    Jitted end-to-end so the pad/transpose on either side of the kernel is a
    single fused layout copy each; prefer nerf_forward_feature_major to avoid
    the transposes entirely.
    """
    packed = pack_params(params)
    out_t = nerf_forward_feature_major(x.T, packed, tn=tn)
    return out_t.T                                             # (N, 4)


def init_params(key, hidden_size=HIDDEN_SIZE):
    """Deterministic synthetic init; weights (out, in), biases (out, 1)."""
    ks = jax.random.split(key, 6)

    def linear(kw, kb, fan_in, fan_out):
        bound = 1.0 / jnp.sqrt(fan_in)
        w = jax.random.uniform(kw, (fan_out, fan_in), jnp.float32, -bound, bound)
        b = jax.random.uniform(kb, (fan_out, 1), jnp.float32, -bound, bound)
        return w, b

    w0, b0 = linear(ks[0], ks[1], INPUT_DIM, hidden_size)
    w1, b1 = linear(ks[2], ks[3], hidden_size, hidden_size)
    w2, b2 = linear(ks[4], ks[5], hidden_size, OUTPUT_DIM)
    return {"w0": w0, "b0": b0, "w1": w1, "b1": b1, "w2": w2, "b2": b2}


def nerf_reference(x, p):
    # HIGHEST precision so the f32 reference matmuls match the kernel's true
    # f32 VPU MACs (TPU default matmul precision is bf16-ish).
    hi = jax.lax.Precision.HIGHEST
    h = jnp.maximum(jnp.dot(x, p["w0"].T, precision=hi) + p["b0"].T, 0.0)
    h = jnp.maximum(jnp.dot(h, p["w1"].T, precision=hi) + p["b1"].T, 0.0)
    return jnp.dot(h, p["w2"].T, precision=hi) + p["b2"].T


if __name__ == "__main__":
    key = jax.random.PRNGKey(0)
    kx, kx2, kp = jax.random.split(key, 3)
    params = init_params(kp)

    # Small, ragged batch (not a multiple of 128) -> exercises padding path.
    N = 100
    x = jax.random.normal(kx, (N, INPUT_DIM), dtype=jnp.float32)
    out = jax.block_until_ready(nerf_forward(x, params))
    ref = nerf_reference(x, params)
    assert out.shape == (N, OUTPUT_DIM)
    assert jnp.allclose(out, ref, atol=1e-4, rtol=1e-4)

    # Multi-step grid (tn=128, N=300 -> 3 tiles + pad), nn.Module-style API.
    N2 = 300
    x2 = jax.random.normal(kx2, (N2, INPUT_DIM), dtype=jnp.float32)
    out2 = jax.block_until_ready(nerf_forward(x2, params, tn=128))
    ref2 = nerf_reference(x2, params)
    assert out2.shape == (N2, OUTPUT_DIM)
    assert jnp.allclose(out2, ref2, atol=1e-4, rtol=1e-4)

    # Feature-major fast path (no wrapper transposes).
    packed = pack_params(params)
    out3 = jax.block_until_ready(nerf_forward_feature_major(x2.T, packed))
    assert out3.shape == (OUTPUT_DIM, N2)
    assert jnp.allclose(out3.T, ref2, atol=1e-4, rtol=1e-4)

    print("KERNEL_OK")
</pallas_src>

<mosaic_0001>
module attributes {stable_mosaic.version = 11 : i64} {
  func.func @nerf_kernel(%arg0: i32, %arg1: memref<6x128xf32, #tpu.memory_space<vmem>>, %arg2: memref<8x32xf32, #tpu.memory_space<vmem>>, %arg3: memref<4x128xf32, #tpu.memory_space<vmem>>) attributes {dimension_semantics = [#tpu.dimension_semantics<parallel>], iteration_bounds = array<i64: 1>, scalar_prefetch = 0 : i64, scratch_operands = 0 : i64, tpu.core_type = #tpu.core_type<tc>, window_params = [{transform_indices = @transform_0, window_bounds = array<i64: 6, 128>}, {pipeline_mode = #tpu.pipeline_mode<synchronous>, transform_indices = @transform_1, window_bounds = array<i64: 8, 32>}, {transform_indices = @transform_2, window_bounds = array<i64: 4, 128>}]} {
    %c0 = arith.constant 0 : index
    %c0_0 = arith.constant 0 : index
    %0 = vector.load %arg1[%c0, %c0_0] : memref<6x128xf32, #tpu.memory_space<vmem>>, vector<6x128xf32>
    %c0_1 = arith.constant 0 : index
    %c0_2 = arith.constant 0 : index
    %1 = vector.load %arg2[%c0_1, %c0_2] : memref<8x32xf32, #tpu.memory_space<vmem>>, vector<8x32xf32>
    %2 = vector.extract_strided_slice %1 {offsets = [0, 0], sizes = [8, 6], strides = [1, 1]} : vector<8x32xf32> to vector<8x6xf32>
    %3 = vector.extract_strided_slice %1 {offsets = [0, 6], sizes = [8, 8], strides = [1, 1]} : vector<8x32xf32> to vector<8x8xf32>
    %4 = vector.extract_strided_slice %1 {offsets = [0, 14], sizes = [4, 8], strides = [1, 1]} : vector<8x32xf32> to vector<4x8xf32>
    %5 = vector.extract_strided_slice %1 {offsets = [0, 22], sizes = [8, 1], strides = [1, 1]} : vector<8x32xf32> to vector<8x1xf32>
    %6 = vector.extract_strided_slice %1 {offsets = [0, 23], sizes = [8, 1], strides = [1, 1]} : vector<8x32xf32> to vector<8x1xf32>
    %7 = vector.extract_strided_slice %1 {offsets = [0, 24], sizes = [4, 1], strides = [1, 1]} : vector<8x32xf32> to vector<4x1xf32>
    %8 = vector.shape_cast %5 : vector<8x1xf32> to vector<8x1xf32>
    %9 = vector.broadcast %8 : vector<8x1xf32> to vector<8x128xf32>
    %10 = vector.extract_strided_slice %2 {offsets = [0, 0], sizes = [8, 1], strides = [1, 1]} : vector<8x6xf32> to vector<8x1xf32>
    %11 = vector.shape_cast %10 : vector<8x1xf32> to vector<8x1xf32>
    %12 = vector.broadcast %11 : vector<8x1xf32> to vector<8x128xf32>
    %13 = vector.extract_strided_slice %0 {offsets = [0, 0], sizes = [1, 128], strides = [1, 1]} : vector<6x128xf32> to vector<1x128xf32>
    %14 = vector.shape_cast %13 : vector<1x128xf32> to vector<1x128xf32>
    %15 = vector.broadcast %14 : vector<1x128xf32> to vector<8x128xf32>
    %16 = arith.mulf %12, %15 : vector<8x128xf32>
    %17 = arith.addf %9, %16 : vector<8x128xf32>
    %18 = vector.extract_strided_slice %2 {offsets = [0, 1], sizes = [8, 1], strides = [1, 1]} : vector<8x6xf32> to vector<8x1xf32>
    %19 = vector.shape_cast %18 : vector<8x1xf32> to vector<8x1xf32>
    %20 = vector.broadcast %19 : vector<8x1xf32> to vector<8x128xf32>
    %21 = vector.extract_strided_slice %0 {offsets = [1, 0], sizes = [1, 128], strides = [1, 1]} : vector<6x128xf32> to vector<1x128xf32>
    %22 = vector.shape_cast %21 : vector<1x128xf32> to vector<1x128xf32>
    %23 = vector.broadcast %22 : vector<1x128xf32> to vector<8x128xf32>
    %24 = arith.mulf %20, %23 : vector<8x128xf32>
    %25 = arith.addf %17, %24 : vector<8x128xf32>
    %26 = vector.extract_strided_slice %2 {offsets = [0, 2], sizes = [8, 1], strides = [1, 1]} : vector<8x6xf32> to vector<8x1xf32>
    %27 = vector.shape_cast %26 : vector<8x1xf32> to vector<8x1xf32>
    %28 = vector.broadcast %27 : vector<8x1xf32> to vector<8x128xf32>
    %29 = vector.extract_strided_slice %0 {offsets = [2, 0], sizes = [1, 128], strides = [1, 1]} : vector<6x128xf32> to vector<1x128xf32>
    %30 = vector.shape_cast %29 : vector<1x128xf32> to vector<1x128xf32>
    %31 = vector.broadcast %30 : vector<1x128xf32> to vector<8x128xf32>
    %32 = arith.mulf %28, %31 : vector<8x128xf32>
    %33 = arith.addf %25, %32 : vector<8x128xf32>
    %34 = vector.extract_strided_slice %2 {offsets = [0, 3], sizes = [8, 1], strides = [1, 1]} : vector<8x6xf32> to vector<8x1xf32>
    %35 = vector.shape_cast %34 : vector<8x1xf32> to vector<8x1xf32>
    %36 = vector.broadcast %35 : vector<8x1xf32> to vector<8x128xf32>
    %37 = vector.extract_strided_slice %0 {offsets = [3, 0], sizes = [1, 128], strides = [1, 1]} : vector<6x128xf32> to vector<1x128xf32>
    %38 = vector.shape_cast %37 : vector<1x128xf32> to vector<1x128xf32>
    %39 = vector.broadcast %38 : vector<1x128xf32> to vector<8x128xf32>
    %40 = arith.mulf %36, %39 : vector<8x128xf32>
    %41 = arith.addf %33, %40 : vector<8x128xf32>
    %42 = vector.extract_strided_slice %2 {offsets = [0, 4], sizes = [8, 1], strides = [1, 1]} : vector<8x6xf32> to vector<8x1xf32>
    %43 = vector.shape_cast %42 : vector<8x1xf32> to vector<8x1xf32>
    %44 = vector.broadcast %43 : vector<8x1xf32> to vector<8x128xf32>
    %45 = vector.extract_strided_slice %0 {offsets = [4, 0], sizes = [1, 128], strides = [1, 1]} : vector<6x128xf32> to vector<1x128xf32>
    %46 = vector.shape_cast %45 : vector<1x128xf32> to vector<1x128xf32>
    %47 = vector.broadcast %46 : vector<1x128xf32> to vector<8x128xf32>
    %48 = arith.mulf %44, %47 : vector<8x128xf32>
    %49 = arith.addf %41, %48 : vector<8x128xf32>
    %50 = vector.extract_strided_slice %2 {offsets = [0, 5], sizes = [8, 1], strides = [1, 1]} : vector<8x6xf32> to vector<8x1xf32>
    %51 = vector.shape_cast %50 : vector<8x1xf32> to vector<8x1xf32>
    %52 = vector.broadcast %51 : vector<8x1xf32> to vector<8x128xf32>
    %53 = vector.extract_strided_slice %0 {offsets = [5, 0], sizes = [1, 128], strides = [1, 1]} : vector<6x128xf32> to vector<1x128xf32>
    %54 = vector.shape_cast %53 : vector<1x128xf32> to vector<1x128xf32>
    %55 = vector.broadcast %54 : vector<1x128xf32> to vector<8x128xf32>
    %56 = arith.mulf %52, %55 : vector<8x128xf32>
    %57 = arith.addf %49, %56 : vector<8x128xf32>
    %cst = arith.constant 0.000000e+00 : f32
    %58 = vector.broadcast %cst : f32 to vector<8x128xf32>
    %59 = arith.maximumf %57, %58 : vector<8x128xf32>
    %60 = vector.shape_cast %6 : vector<8x1xf32> to vector<8x1xf32>
    %61 = vector.broadcast %60 : vector<8x1xf32> to vector<8x128xf32>
    %62 = vector.extract_strided_slice %3 {offsets = [0, 0], sizes = [8, 1], strides = [1, 1]} : vector<8x8xf32> to vector<8x1xf32>
    %63 = vector.shape_cast %62 : vector<8x1xf32> to vector<8x1xf32>
    %64 = vector.broadcast %63 : vector<8x1xf32> to vector<8x128xf32>
    %65 = vector.extract_strided_slice %59 {offsets = [0, 0], sizes = [1, 128], strides = [1, 1]} : vector<8x128xf32> to vector<1x128xf32>
    %66 = vector.shape_cast %65 : vector<1x128xf32> to vector<1x128xf32>
    %67 = vector.broadcast %66 : vector<1x128xf32> to vector<8x128xf32>
    %68 = arith.mulf %64, %67 : vector<8x128xf32>
    %69 = arith.addf %61, %68 : vector<8x128xf32>
    %70 = vector.extract_strided_slice %3 {offsets = [0, 1], sizes = [8, 1], strides = [1, 1]} : vector<8x8xf32> to vector<8x1xf32>
    %71 = vector.shape_cast %70 : vector<8x1xf32> to vector<8x1xf32>
    %72 = vector.broadcast %71 : vector<8x1xf32> to vector<8x128xf32>
    %73 = vector.extract_strided_slice %59 {offsets = [1, 0], sizes = [1, 128], strides = [1, 1]} : vector<8x128xf32> to vector<1x128xf32>
    %74 = vector.shape_cast %73 : vector<1x128xf32> to vector<1x128xf32>
    %75 = vector.broadcast %74 : vector<1x128xf32> to vector<8x128xf32>
    %76 = arith.mulf %72, %75 : vector<8x128xf32>
    %77 = arith.addf %69, %76 : vector<8x128xf32>
    %78 = vector.extract_strided_slice %3 {offsets = [0, 2], sizes = [8, 1], strides = [1, 1]} : vector<8x8xf32> to vector<8x1xf32>
    %79 = vector.shape_cast %78 : vector<8x1xf32> to vector<8x1xf32>
    %80 = vector.broadcast %79 : vector<8x1xf32> to vector<8x128xf32>
    %81 = vector.extract_strided_slice %59 {offsets = [2, 0], sizes = [1, 128], strides = [1, 1]} : vector<8x128xf32> to vector<1x128xf32>
    %82 = vector.shape_cast %81 : vector<1x128xf32> to vector<1x128xf32>
    %83 = vector.broadcast %82 : vector<1x128xf32> to vector<8x128xf32>
    %84 = arith.mulf %80, %83 : vector<8x128xf32>
    %85 = arith.addf %77, %84 : vector<8x128xf32>
    %86 = vector.extract_strided_slice %3 {offsets = [0, 3], sizes = [8, 1], strides = [1, 1]} : vector<8x8xf32> to vector<8x1xf32>
    %87 = vector.shape_cast %86 : vector<8x1xf32> to vector<8x1xf32>
    %88 = vector.broadcast %87 : vector<8x1xf32> to vector<8x128xf32>
    %89 = vector.extract_strided_slice %59 {offsets = [3, 0], sizes = [1, 128], strides = [1, 1]} : vector<8x128xf32> to vector<1x128xf32>
    %90 = vector.shape_cast %89 : vector<1x128xf32> to vector<1x128xf32>
    %91 = vector.broadcast %90 : vector<1x128xf32> to vector<8x128xf32>
    %92 = arith.mulf %88, %91 : vector<8x128xf32>
    %93 = arith.addf %85, %92 : vector<8x128xf32>
    %94 = vector.extract_strided_slice %3 {offsets = [0, 4], sizes = [8, 1], strides = [1, 1]} : vector<8x8xf32> to vector<8x1xf32>
    %95 = vector.shape_cast %94 : vector<8x1xf32> to vector<8x1xf32>
    %96 = vector.broadcast %95 : vector<8x1xf32> to vector<8x128xf32>
    %97 = vector.extract_strided_slice %59 {offsets = [4, 0], sizes = [1, 128], strides = [1, 1]} : vector<8x128xf32> to vector<1x128xf32>
    %98 = vector.shape_cast %97 : vector<1x128xf32> to vector<1x128xf32>
    %99 = vector.broadcast %98 : vector<1x128xf32> to vector<8x128xf32>
    %100 = arith.mulf %96, %99 : vector<8x128xf32>
    %101 = arith.addf %93, %100 : vector<8x128xf32>
    %102 = vector.extract_strided_slice %3 {offsets = [0, 5], sizes = [8, 1], strides = [1, 1]} : vector<8x8xf32> to vector<8x1xf32>
    %103 = vector.shape_cast %102 : vector<8x1xf32> to vector<8x1xf32>
    %104 = vector.broadcast %103 : vector<8x1xf32> to vector<8x128xf32>
    %105 = vector.extract_strided_slice %59 {offsets = [5, 0], sizes = [1, 128], strides = [1, 1]} : vector<8x128xf32> to vector<1x128xf32>
    %106 = vector.shape_cast %105 : vector<1x128xf32> to vector<1x128xf32>
    %107 = vector.broadcast %106 : vector<1x128xf32> to vector<8x128xf32>
    %108 = arith.mulf %104, %107 : vector<8x128xf32>
    %109 = arith.addf %101, %108 : vector<8x128xf32>
    %110 = vector.extract_strided_slice %3 {offsets = [0, 6], sizes = [8, 1], strides = [1, 1]} : vector<8x8xf32> to vector<8x1xf32>
    %111 = vector.shape_cast %110 : vector<8x1xf32> to vector<8x1xf32>
    %112 = vector.broadcast %111 : vector<8x1xf32> to vector<8x128xf32>
    %113 = vector.extract_strided_slice %59 {offsets = [6, 0], sizes = [1, 128], strides = [1, 1]} : vector<8x128xf32> to vector<1x128xf32>
    %114 = vector.shape_cast %113 : vector<1x128xf32> to vector<1x128xf32>
    %115 = vector.broadcast %114 : vector<1x128xf32> to vector<8x128xf32>
    %116 = arith.mulf %112, %115 : vector<8x128xf32>
    %117 = arith.addf %109, %116 : vector<8x128xf32>
    %118 = vector.extract_strided_slice %3 {offsets = [0, 7], sizes = [8, 1], strides = [1, 1]} : vector<8x8xf32> to vector<8x1xf32>
    %119 = vector.shape_cast %118 : vector<8x1xf32> to vector<8x1xf32>
    %120 = vector.broadcast %119 : vector<8x1xf32> to vector<8x128xf32>
    %121 = vector.extract_strided_slice %59 {offsets = [7, 0], sizes = [1, 128], strides = [1, 1]} : vector<8x128xf32> to vector<1x128xf32>
    %122 = vector.shape_cast %121 : vector<1x128xf32> to vector<1x128xf32>
    %123 = vector.broadcast %122 : vector<1x128xf32> to vector<8x128xf32>
    %124 = arith.mulf %120, %123 : vector<8x128xf32>
    %125 = arith.addf %117, %124 : vector<8x128xf32>
    %cst_3 = arith.constant 0.000000e+00 : f32
    %126 = vector.broadcast %cst_3 : f32 to vector<8x128xf32>
    %127 = arith.maximumf %125, %126 : vector<8x128xf32>
    %128 = vector.shape_cast %7 : vector<4x1xf32> to vector<4x1xf32>
    %129 = vector.broadcast %128 : vector<4x1xf32> to vector<4x128xf32>
    %130 = vector.extract_strided_slice %4 {offsets = [0, 0], sizes = [4, 1], strides = [1, 1]} : vector<4x8xf32> to vector<4x1xf32>
    %131 = vector.shape_cast %130 : vector<4x1xf32> to vector<4x1xf32>
    %132 = vector.broadcast %131 : vector<4x1xf32> to vector<4x128xf32>
    %133 = vector.extract_strided_slice %127 {offsets = [0, 0], sizes = [1, 128], strides = [1, 1]} : vector<8x128xf32> to vector<1x128xf32>
    %134 = vector.shape_cast %133 : vector<1x128xf32> to vector<1x128xf32>
    %135 = vector.broadcast %134 : vector<1x128xf32> to vector<4x128xf32>
    %136 = arith.mulf %132, %135 : vector<4x128xf32>
    %137 = arith.addf %129, %136 : vector<4x128xf32>
    %138 = vector.extract_strided_slice %4 {offsets = [0, 1], sizes = [4, 1], strides = [1, 1]} : vector<4x8xf32> to vector<4x1xf32>
    %139 = vector.shape_cast %138 : vector<4x1xf32> to vector<4x1xf32>
    %140 = vector.broadcast %139 : vector<4x1xf32> to vector<4x128xf32>
    %141 = vector.extract_strided_slice %127 {offsets = [1, 0], sizes = [1, 128], strides = [1, 1]} : vector<8x128xf32> to vector<1x128xf32>
    %142 = vector.shape_cast %141 : vector<1x128xf32> to vector<1x128xf32>
    %143 = vector.broadcast %142 : vector<1x128xf32> to vector<4x128xf32>
    %144 = arith.mulf %140, %143 : vector<4x128xf32>
    %145 = arith.addf %137, %144 : vector<4x128xf32>
    %146 = vector.extract_strided_slice %4 {offsets = [0, 2], sizes = [4, 1], strides = [1, 1]} : vector<4x8xf32> to vector<4x1xf32>
    %147 = vector.shape_cast %146 : vector<4x1xf32> to vector<4x1xf32>
    %148 = vector.broadcast %147 : vector<4x1xf32> to vector<4x128xf32>
    %149 = vector.extract_strided_slice %127 {offsets = [2, 0], sizes = [1, 128], strides = [1, 1]} : vector<8x128xf32> to vector<1x128xf32>
    %150 = vector.shape_cast %149 : vector<1x128xf32> to vector<1x128xf32>
    %151 = vector.broadcast %150 : vector<1x128xf32> to vector<4x128xf32>
    %152 = arith.mulf %148, %151 : vector<4x128xf32>
    %153 = arith.addf %145, %152 : vector<4x128xf32>
    %154 = vector.extract_strided_slice %4 {offsets = [0, 3], sizes = [4, 1], strides = [1, 1]} : vector<4x8xf32> to vector<4x1xf32>
    %155 = vector.shape_cast %154 : vector<4x1xf32> to vector<4x1xf32>
    %156 = vector.broadcast %155 : vector<4x1xf32> to vector<4x128xf32>
    %157 = vector.extract_strided_slice %127 {offsets = [3, 0], sizes = [1, 128], strides = [1, 1]} : vector<8x128xf32> to vector<1x128xf32>
    %158 = vector.shape_cast %157 : vector<1x128xf32> to vector<1x128xf32>
    %159 = vector.broadcast %158 : vector<1x128xf32> to vector<4x128xf32>
    %160 = arith.mulf %156, %159 : vector<4x128xf32>
    %161 = arith.addf %153, %160 : vector<4x128xf32>
    %162 = vector.extract_strided_slice %4 {offsets = [0, 4], sizes = [4, 1], strides = [1, 1]} : vector<4x8xf32> to vector<4x1xf32>
    %163 = vector.shape_cast %162 : vector<4x1xf32> to vector<4x1xf32>
    %164 = vector.broadcast %163 : vector<4x1xf32> to vector<4x128xf32>
    %165 = vector.extract_strided_slice %127 {offsets = [4, 0], sizes = [1, 128], strides = [1, 1]} : vector<8x128xf32> to vector<1x128xf32>
    %166 = vector.shape_cast %165 : vector<1x128xf32> to vector<1x128xf32>
    %167 = vector.broadcast %166 : vector<1x128xf32> to vector<4x128xf32>
    %168 = arith.mulf %164, %167 : vector<4x128xf32>
    %169 = arith.addf %161, %168 : vector<4x128xf32>
    %170 = vector.extract_strided_slice %4 {offsets = [0, 5], sizes = [4, 1], strides = [1, 1]} : vector<4x8xf32> to vector<4x1xf32>
    %171 = vector.shape_cast %170 : vector<4x1xf32> to vector<4x1xf32>
    %172 = vector.broadcast %171 : vector<4x1xf32> to vector<4x128xf32>
    %173 = vector.extract_strided_slice %127 {offsets = [5, 0], sizes = [1, 128], strides = [1, 1]} : vector<8x128xf32> to vector<1x128xf32>
    %174 = vector.shape_cast %173 : vector<1x128xf32> to vector<1x128xf32>
    %175 = vector.broadcast %174 : vector<1x128xf32> to vector<4x128xf32>
    %176 = arith.mulf %172, %175 : vector<4x128xf32>
    %177 = arith.addf %169, %176 : vector<4x128xf32>
    %178 = vector.extract_strided_slice %4 {offsets = [0, 6], sizes = [4, 1], strides = [1, 1]} : vector<4x8xf32> to vector<4x1xf32>
    %179 = vector.shape_cast %178 : vector<4x1xf32> to vector<4x1xf32>
    %180 = vector.broadcast %179 : vector<4x1xf32> to vector<4x128xf32>
    %181 = vector.extract_strided_slice %127 {offsets = [6, 0], sizes = [1, 128], strides = [1, 1]} : vector<8x128xf32> to vector<1x128xf32>
    %182 = vector.shape_cast %181 : vector<1x128xf32> to vector<1x128xf32>
    %183 = vector.broadcast %182 : vector<1x128xf32> to vector<4x128xf32>
    %184 = arith.mulf %180, %183 : vector<4x128xf32>
    %185 = arith.addf %177, %184 : vector<4x128xf32>
    %186 = vector.extract_strided_slice %4 {offsets = [0, 7], sizes = [4, 1], strides = [1, 1]} : vector<4x8xf32> to vector<4x1xf32>
    %187 = vector.shape_cast %186 : vector<4x1xf32> to vector<4x1xf32>
    %188 = vector.broadcast %187 : vector<4x1xf32> to vector<4x128xf32>
    %189 = vector.extract_strided_slice %127 {offsets = [7, 0], sizes = [1, 128], strides = [1, 1]} : vector<8x128xf32> to vector<1x128xf32>
    %190 = vector.shape_cast %189 : vector<1x128xf32> to vector<1x128xf32>
    %191 = vector.broadcast %190 : vector<1x128xf32> to vector<4x128xf32>
    %192 = arith.mulf %188, %191 : vector<4x128xf32>
    %193 = arith.addf %185, %192 : vector<4x128xf32>
    %c0_4 = arith.constant 0 : index
    %c0_5 = arith.constant 0 : index
    %194 = vector.load %arg3[%c0_4, %c0_5] : memref<4x128xf32, #tpu.memory_space<vmem>>, vector<4x128xf32>
    tpu.vector_store %arg3[%c0_4, %c0_5], %193 {strides = array<i32>} : memref<4x128xf32, #tpu.memory_space<vmem>>, vector<4x128xf32>,
    return
  }
  func.func @transform_0(%arg0: i32) -> (i32, i32) {
    %c0_i32 = arith.constant 0 : i32
    %c0_i32_0 = arith.constant 0 : i32
    return %c0_i32, %arg0 : i32, i32
  }
  func.func @transform_1(%arg0: i32) -> (i32, i32) {
    %c0_i32 = arith.constant 0 : i32
    %c0_i32_0 = arith.constant 0 : i32
    %c0_i32_1 = arith.constant 0 : i32
    return %c0_i32, %c0_i32_0 : i32, i32
  }
  func.func @transform_2(%arg0: i32) -> (i32, i32) {
    %c0_i32 = arith.constant 0 : i32
    %c0_i32_0 = arith.constant 0 : i32
    return %c0_i32, %arg0 : i32, i32
  }
}

</mosaic_0001>

<llo_original>
// kernel: nerf_forward.1
$region0: #{nerf_forward.1}
  #allocation0 [shape = 'u32[]', space=smem, size = 0x4, offset = 0x4, fixed_abs, tag = 'smem constant byte address 0x4 - core index']
  #allocation1 [shape = 'u32[144,128]{1,0:T(1,128)}', space=vmem, size = 0x12000, scoped, tag = 'internal scratch']
  %s0 = inlined_call_operand.vmem [shape: f32[6,128], index: 0, kind: input, shape index: {}]
  %s1 = inlined_call_operand.vmem [shape: f32[8,32], index: 1, kind: input, shape index: {}]
  %s2 = inlined_call_operand.vmem [shape: f32[4,128], index: 2, kind: output, shape index: {}]
  %s3 = sld [smem:[#allocation0]]
  $region18: #{nerf_forward.1} parent=0
    _
  %s5 = ssub.s32 1, %s3
  %s6 = scalar_select 0, %s5, %s3
  // Predicated region
  $region2: #{nerf_forward.1} parent=0 // pred_check
    _
  $region3: #{nerf_forward.1} parent=0 // pred_check_branch
    %8 = sbr.rel (0) target = $region5
  $region4: #{nerf_forward.1} parent=0 // pred_region
    _
  $region5: #{nerf_forward.1} parent=0 // pred_fallthru
    _
  // Predicated region
  $region6: #{nerf_forward.1} parent=0 // pred_check
    _
  $region7: #{nerf_forward.1} parent=0 // pred_check_branch
    %10 = sbr.rel (0) target = $region9
  $region8: #{nerf_forward.1} parent=0 // pred_region
    _
  $region9: #{nerf_forward.1} parent=0 // pred_fallthru
    _
  %v11 = vld [vmem:[%s0] sm:$0x3f]
  %v12 = vld [vmem:[%s1] sm:$0xff]
  %14 = vset.pattern.permute.xlu0 22
  %15 = vperm.xlu0 %14, %v12
  %v16 = vpop.permute.xlu0 %15
  %18 = vset.pattern.permute.xlu0 0
  %19 = vperm.xlu0 %18, %v12
  %v20 = vpop.permute.xlu0 %19
  %v22 = vlaneseq
  %v23 = vshrl.u32 %v22, 7
  %v24 = vsub.s32 0, %v23
  %v25 = vrot.slane %v11, %v24
  %v26 = vmul.f32 %v20, %v25
  %v27 = vadd.f32 %v16, %v26
  %28 = vset.pattern.permute.xlu0 1
  %29 = vperm.xlu0 %28, %v12
  %v30 = vpop.permute.xlu0 %29
  %v32 = vlaneseq
  %v33 = vshrl.u32 %v32, 7
  %v34 = vsub.s32 1, %v33
  %v35 = vrot.slane %v11, %v34
  %v36 = vmul.f32 %v30, %v35
  %v37 = vadd.f32 %v27, %v36
  %38 = vset.pattern.permute.xlu0 2
  %39 = vperm.xlu0 %38, %v12
  %v40 = vpop.permute.xlu0 %39
  %v42 = vlaneseq
  %v43 = vshrl.u32 %v42, 7
  %v44 = vsub.s32 2, %v43
  %v45 = vrot.slane %v11, %v44
  %v46 = vmul.f32 %v40, %v45
  %v47 = vadd.f32 %v37, %v46
  %48 = vset.pattern.permute.xlu0 3
  %49 = vperm.xlu0 %48, %v12
  %v50 = vpop.permute.xlu0 %49
  %v52 = vlaneseq
  %v53 = vshrl.u32 %v52, 7
  %v54 = vsub.s32 3, %v53
  %v55 = vrot.slane %v11, %v54
  %v56 = vmul.f32 %v50, %v55
  %v57 = vadd.f32 %v47, %v56
  %58 = vset.pattern.permute.xlu0 4
  %59 = vperm.xlu0 %58, %v12
  %v60 = vpop.permute.xlu0 %59
  %v62 = vlaneseq
  %v63 = vshrl.u32 %v62, 7
  %v64 = vsub.s32 4, %v63
  %v65 = vrot.slane %v11, %v64
  %v66 = vmul.f32 %v60, %v65
  %v67 = vadd.f32 %v57, %v66
  %68 = vset.pattern.permute.xlu0 5
  %69 = vperm.xlu0 %68, %v12
  %v70 = vpop.permute.xlu0 %69
  %v72 = vlaneseq
  %v73 = vshrl.u32 %v72, 7
  %v74 = vsub.s32 5, %v73
  %v75 = vrot.slane %v11, %v74
  %v76 = vmul.f32 %v70, %v75
  %v77 = vadd.f32 %v67, %v76
  %v78 = vmax.f32 %v77, 0.0
  %79 = vset.pattern.permute.xlu0 23
  %80 = vperm.xlu0 %79, %v12
  %v81 = vpop.permute.xlu0 %80
  %83 = vset.pattern.permute.xlu0 6
  %84 = vperm.xlu0 %83, %v12
  %v85 = vpop.permute.xlu0 %84
  %v87 = vlaneseq
  %v88 = vshrl.u32 %v87, 7
  %v89 = vsub.s32 0, %v88
  %v90 = vrot.slane %v78, %v89
  %v91 = vmul.f32 %v85, %v90
  %v92 = vadd.f32 %v81, %v91
  %93 = vset.pattern.permute.xlu0 7
  %94 = vperm.xlu0 %93, %v12
  %v95 = vpop.permute.xlu0 %94
  %v97 = vlaneseq
  %v98 = vshrl.u32 %v97, 7
  %v99 = vsub.s32 1, %v98
  %v100 = vrot.slane %v78, %v99
  %v101 = vmul.f32 %v95, %v100
  %v102 = vadd.f32 %v92, %v101
  %103 = vset.pattern.permute.xlu0 8
  %104 = vperm.xlu0 %103, %v12
  %v105 = vpop.permute.xlu0 %104
  %v107 = vlaneseq
  %v108 = vshrl.u32 %v107, 7
  %v109 = vsub.s32 2, %v108
  %v110 = vrot.slane %v78, %v109
  %v111 = vmul.f32 %v105, %v110
  %v112 = vadd.f32 %v102, %v111
  %113 = vset.pattern.permute.xlu0 9
  %114 = vperm.xlu0 %113, %v12
  %v115 = vpop.permute.xlu0 %114
  %v117 = vlaneseq
  %v118 = vshrl.u32 %v117, 7
  %v119 = vsub.s32 3, %v118
  %v120 = vrot.slane %v78, %v119
  %v121 = vmul.f32 %v115, %v120
  %v122 = vadd.f32 %v112, %v121
  %123 = vset.pattern.permute.xlu0 10
  %124 = vperm.xlu0 %123, %v12
  %v125 = vpop.permute.xlu0 %124
  %v127 = vlaneseq
  %v128 = vshrl.u32 %v127, 7
  %v129 = vsub.s32 4, %v128
  %v130 = vrot.slane %v78, %v129
  %v131 = vmul.f32 %v125, %v130
  %v132 = vadd.f32 %v122, %v131
  %133 = vset.pattern.permute.xlu0 11
  %134 = vperm.xlu0 %133, %v12
  %v135 = vpop.permute.xlu0 %134
  %v137 = vlaneseq
  %v138 = vshrl.u32 %v137, 7
  %v139 = vsub.s32 5, %v138
  %v140 = vrot.slane %v78, %v139
  %v141 = vmul.f32 %v135, %v140
  %v142 = vadd.f32 %v132, %v141
  %143 = vset.pattern.permute.xlu0 12
  %144 = vperm.xlu0 %143, %v12
  %v145 = vpop.permute.xlu0 %144
  %v147 = vlaneseq
  %v148 = vshrl.u32 %v147, 7
  %v149 = vsub.s32 6, %v148
  %v150 = vrot.slane %v78, %v149
  %v151 = vmul.f32 %v145, %v150
  %v152 = vadd.f32 %v142, %v151
  %153 = vset.pattern.permute.xlu0 13
  %154 = vperm.xlu0 %153, %v12
  %v155 = vpop.permute.xlu0 %154
  %v157 = vlaneseq
  %v158 = vshrl.u32 %v157, 7
  %v159 = vsub.s32 7, %v158
  %v160 = vrot.slane %v78, %v159
  %v161 = vmul.f32 %v155, %v160
  %v162 = vadd.f32 %v152, %v161
  %v163 = vmax.f32 %v162, 0.0
  %164 = vset.pattern.permute.xlu0 24
  %165 = vperm.xlu0 %164, %v12
  %v166 = vpop.permute.xlu0 %165
  %168 = vset.pattern.permute.xlu0 14
  %169 = vperm.xlu0 %168, %v12
  %v170 = vpop.permute.xlu0 %169
  %v172 = vlaneseq
  %v173 = vshrl.u32 %v172, 7
  %v174 = vsub.s32 0, %v173
  %v175 = vrot.slane %v163, %v174
  %v176 = vmul.f32 %v170, %v175
  %v177 = vadd.f32 %v166, %v176
  %178 = vset.pattern.permute.xlu0 15
  %179 = vperm.xlu0 %178, %v12
  %v180 = vpop.permute.xlu0 %179
  %v182 = vlaneseq
  %v183 = vshrl.u32 %v182, 7
  %v184 = vsub.s32 1, %v183
  %v185 = vrot.slane %v163, %v184
  %v186 = vmul.f32 %v180, %v185
  %v187 = vadd.f32 %v177, %v186
  %188 = vset.pattern.permute.xlu0 16
  %189 = vperm.xlu0 %188, %v12
  %v190 = vpop.permute.xlu0 %189
  %v192 = vlaneseq
  %v193 = vshrl.u32 %v192, 7
  %v194 = vsub.s32 2, %v193
  %v195 = vrot.slane %v163, %v194
  %v196 = vmul.f32 %v190, %v195
  %v197 = vadd.f32 %v187, %v196
  %198 = vset.pattern.permute.xlu0 17
  %199 = vperm.xlu0 %198, %v12
  %v200 = vpop.permute.xlu0 %199
  %v202 = vlaneseq
  %v203 = vshrl.u32 %v202, 7
  %v204 = vsub.s32 3, %v203
  %v205 = vrot.slane %v163, %v204
  %v206 = vmul.f32 %v200, %v205
  %v207 = vadd.f32 %v197, %v206
  %208 = vset.pattern.permute.xlu0 18
  %209 = vperm.xlu0 %208, %v12
  %v210 = vpop.permute.xlu0 %209
  %v212 = vlaneseq
  %v213 = vshrl.u32 %v212, 7
  %v214 = vsub.s32 4, %v213
  %v215 = vrot.slane %v163, %v214
  %v216 = vmul.f32 %v210, %v215
  %v217 = vadd.f32 %v207, %v216
  %218 = vset.pattern.permute.xlu0 19
  %219 = vperm.xlu0 %218, %v12
  %v220 = vpop.permute.xlu0 %219
  %v222 = vlaneseq
  %v223 = vshrl.u32 %v222, 7
  %v224 = vsub.s32 5, %v223
  %v225 = vrot.slane %v163, %v224
  %v226 = vmul.f32 %v220, %v225
  %v227 = vadd.f32 %v217, %v226
  %228 = vset.pattern.permute.xlu0 20
  %229 = vperm.xlu0 %228, %v12
  %v230 = vpop.permute.xlu0 %229
  %v232 = vlaneseq
  %v233 = vshrl.u32 %v232, 7
  %v234 = vsub.s32 6, %v233
  %v235 = vrot.slane %v163, %v234
  %v236 = vmul.f32 %v230, %v235
  %v237 = vadd.f32 %v227, %v236
  %238 = vset.pattern.permute.xlu0 21
  %239 = vperm.xlu0 %238, %v12
  %v240 = vpop.permute.xlu0 %239
  %v242 = vlaneseq
  %v243 = vshrl.u32 %v242, 7
  %v244 = vsub.s32 7, %v243
  %v245 = vrot.slane %v163, %v244
  %v246 = vmul.f32 %v240, %v245
  %v247 = vadd.f32 %v237, %v246
  %248 = vst [vmem:[%s2] sm:$0xf] %v247
  // Predicated region
  $region10: #{nerf_forward.1} parent=0 // pred_check
    _
  $region11: #{nerf_forward.1} parent=0 // pred_check_branch
    %250 = sbr.rel (0) target = $region13
  $region12: #{nerf_forward.1} parent=0 // pred_region
    _
  $region13: #{nerf_forward.1} parent=0 // pred_fallthru
    _
  // Predicated region
  $region14: #{nerf_forward.1} parent=0 // pred_check
    _
  $region15: #{nerf_forward.1} parent=0 // pred_check_branch
    %252 = sbr.rel (0) target = $region17
  $region16: #{nerf_forward.1} parent=0 // pred_region
    _
  $region17: #{nerf_forward.1} parent=0 // pred_fallthru
    _

</llo_original>
